<compile_context>
chip_gen: v5e
topology: v5e:2x2
jax: 0.10.0
libtpu: 0.0.40
codegen_flags: <defaults>
</compile_context>

<pallas_src>
import jax
import jax.numpy as jnp
from jax.experimental import pallas as pl
from jax.experimental.pallas import tpu as pltpu


def indrnn_kernel(x_ref, wub_ref, wfcb_ref, out_ref):
    """Whole IndRNNModel forward in one gridless, VMEM-resident invocation.

    x_ref:    (B, T, I)   input, batch-first exactly as the module receives it
    wub_ref:  (I+2, H)    packed [w (I rows) ; u (1 row) ; b (1 row)]
    wfcb_ref: (H+1, O)    packed [w_fc (H rows) ; b_fc (1 row)]
    out_ref:  (B, O)
    """
    B, T, I = x_ref.shape
    H = wub_ref.shape[1]

    # Unpack the packed parameter tiles (static sublane slices, loop-invariant).
    w = wub_ref[0:I, :]               # (I, H)  input projection
    u = wub_ref[I:I + 1, :]           # (1, H)  element-wise recurrent weight
    b = wub_ref[I + 1:I + 2, :]       # (1, H)  cell bias
    w_fc = wfcb_ref[0:H, :]           # (H, O)
    b_fc = wfcb_ref[H:H + 1, :]       # (1, O)

    # One batched MXU matmul for every timestep's input projection, bias fused.
    # (B,T,I) -> (B*T,I) merges the leading dim into the sublane dim and is
    # layout-preserving at these shapes (no real data movement).
    x2d = x_ref[...].reshape(B * T, I)
    xw = jnp.dot(x2d, w, preferred_element_type=jnp.float32) + b   # (B*T, H)
    xw = xw.reshape(B, T, H)                                       # (B, T, H)

    # IndRNN recurrence: element-wise recurrent weight -> pure VPU/EUP per step.
    # T is tiny, so a Python unroll is fine; switch to lax.fori_loop + a VMEM
    # scratch for xw once T/H grow (keeps vreg pressure bounded).
    h = jnp.zeros((B, H), jnp.float32)
    for t in range(T):
        h = jnp.tanh(h * u + xw[:, t, :])                          # (B, H)

    # fcOutput = fc(h_T)
    out_ref[...] = jnp.dot(h, w_fc, preferred_element_type=jnp.float32) + b_fc


def pack_params(params):
    """Pack 6 small parameters into 2 operands (done once, outside the forward)."""
    wub = jnp.concatenate([params["w"], params["u"], params["b"]], axis=0)  # (I+2, H)
    wfcb = jnp.concatenate([params["w_fc"], params["b_fc"]], axis=0)        # (H+1, O)
    return wub, wfcb


@jax.jit
def indrnn_forward(x, wub, wfcb):
    """x: (B, T, I) batch-first, as in the PyTorch module. No wrapper-side layout ops."""
    B = x.shape[0]
    O = wfcb.shape[1]
    vmem = pl.BlockSpec(memory_space=pltpu.MemorySpace.VMEM)
    return pl.pallas_call(
        indrnn_kernel,
        out_shape=jax.ShapeDtypeStruct((B, O), jnp.float32),
        in_specs=[vmem, vmem, vmem],
        out_specs=vmem,
    )(x, wub, wfcb)


def init_params(key, input_dim, hidden_num, output_dim):
    """Matches the PyTorch module's init styles (randn for cell, Linear for fc)."""
    ks = jax.random.split(key, 5)
    bound = 1.0 / float(hidden_num) ** 0.5
    return {
        # IndRNNCell: torch.randn
        "w": jax.random.normal(ks[0], (input_dim, hidden_num), jnp.float32),
        "u": jax.random.normal(ks[1], (1, hidden_num), jnp.float32),
        "b": jax.random.normal(ks[2], (1, hidden_num), jnp.float32),
        # fc = nn.Linear(hiddenNum, outputDim): U(-1/sqrt(H), +1/sqrt(H))
        "w_fc": jax.random.uniform(ks[3], (hidden_num, output_dim), jnp.float32,
                                   -bound, bound),
        "b_fc": jax.random.uniform(ks[4], (1, output_dim), jnp.float32,
                                   -bound, bound),
    }


def reference_forward(x, params):
    """Pure-JAX replica of IndRNNModel.forward for correctness checking."""
    B, T, I = x.shape
    H = params["w"].shape[1]
    h = jnp.zeros((B, H), jnp.float32)
    for t in range(T):
        h = jnp.tanh(h * params["u"] + x[:, t, :] @ params["w"] + params["b"])
    return h @ params["w_fc"] + params["b_fc"]


if __name__ == "__main__":
    # x: (batch, time, inputDim)
    B, T, I, H, O = 2, 8, 4, 32, 8

    key = jax.random.PRNGKey(0)
    kx, kp = jax.random.split(key)
    x = jax.random.normal(kx, (B, T, I), jnp.float32)
    params = init_params(kp, I, H, O)
    wub, wfcb = pack_params(params)   # packed once, not per forward call

    out = indrnn_forward(x, wub, wfcb)
    out = jax.block_until_ready(out)

    ref = reference_forward(x, params)
    assert out.shape == (B, O), out.shape
    assert jnp.allclose(out, ref, atol=1e-5, rtol=1e-5), "mismatch vs. reference"

    print("KERNEL_OK")
</pallas_src>

<mosaic_0001>
module attributes {stable_mosaic.version = 11 : i64} {
  func.func @indrnn_kernel(%arg0: memref<2x8x4xf32, #tpu.memory_space<vmem>>, %arg1: memref<6x32xf32, #tpu.memory_space<vmem>>, %arg2: memref<33x8xf32, #tpu.memory_space<vmem>>, %arg3: memref<2x8xf32, #tpu.memory_space<vmem>>) attributes {dimension_semantics = [], scalar_prefetch = 0 : i64, scratch_operands = 0 : i64, tpu.core_type = #tpu.core_type<tc>} {
    %c0 = arith.constant 0 : index
    %c0_0 = arith.constant 0 : index
    %0 = vector.load %arg1[%c0, %c0_0] : memref<6x32xf32, #tpu.memory_space<vmem>>, vector<4x32xf32>
    %c4 = arith.constant 4 : index
    %c0_1 = arith.constant 0 : index
    %1 = vector.load %arg1[%c4, %c0_1] : memref<6x32xf32, #tpu.memory_space<vmem>>, vector<1x32xf32>
    %c5 = arith.constant 5 : index
    %c0_2 = arith.constant 0 : index
    %2 = vector.load %arg1[%c5, %c0_2] : memref<6x32xf32, #tpu.memory_space<vmem>>, vector<1x32xf32>
    %c0_3 = arith.constant 0 : index
    %c0_4 = arith.constant 0 : index
    %3 = vector.load %arg2[%c0_3, %c0_4] : memref<33x8xf32, #tpu.memory_space<vmem>>, vector<32x8xf32>
    %c32 = arith.constant 32 : index
    %c0_5 = arith.constant 0 : index
    %4 = vector.load %arg2[%c32, %c0_5] : memref<33x8xf32, #tpu.memory_space<vmem>>, vector<1x8xf32>
    %c0_6 = arith.constant 0 : index
    %c0_7 = arith.constant 0 : index
    %c0_8 = arith.constant 0 : index
    %5 = vector.load %arg0[%c0_6, %c0_7, %c0_8] : memref<2x8x4xf32, #tpu.memory_space<vmem>>, vector<2x8x4xf32>
    %6 = vector.shape_cast %5 : vector<2x8x4xf32> to vector<16x4xf32>
    %cst = arith.constant dense<0.000000e+00> : vector<16x32xf32>
    %7 = tpu.matmul %6, %0, %cst {dimension_numbers = #tpu.dot_dimension_numbers<[1], [0], [0], [1], [0, 0, 1, 1], [], []>} : vector<16x4xf32>, vector<4x32xf32>, vector<16x32xf32> -> vector<16x32xf32>
    %8 = vector.broadcast %2 : vector<1x32xf32> to vector<16x32xf32>
    %9 = arith.addf %7, %8 : vector<16x32xf32>
    %10 = vector.shape_cast %9 : vector<16x32xf32> to vector<2x8x32xf32>
    %cst_9 = arith.constant 0.000000e+00 : f32
    %11 = vector.broadcast %cst_9 : f32 to vector<2x32xf32>
    %12 = vector.broadcast %1 : vector<1x32xf32> to vector<2x32xf32>
    %13 = arith.mulf %11, %12 : vector<2x32xf32>
    %14 = vector.extract_strided_slice %10 {offsets = [0, 0, 0], sizes = [2, 1, 32], strides = [1, 1, 1]} : vector<2x8x32xf32> to vector<2x1x32xf32>
    %15 = vector.shape_cast %14 : vector<2x1x32xf32> to vector<2x32xf32>
    %16 = arith.addf %13, %15 : vector<2x32xf32>
    %17 = math.tanh %16 : vector<2x32xf32>
    %18 = vector.broadcast %1 : vector<1x32xf32> to vector<2x32xf32>
    %19 = arith.mulf %17, %18 : vector<2x32xf32>
    %20 = vector.extract_strided_slice %10 {offsets = [0, 1, 0], sizes = [2, 1, 32], strides = [1, 1, 1]} : vector<2x8x32xf32> to vector<2x1x32xf32>
    %21 = vector.shape_cast %20 : vector<2x1x32xf32> to vector<2x32xf32>
    %22 = arith.addf %19, %21 : vector<2x32xf32>
    %23 = math.tanh %22 : vector<2x32xf32>
    %24 = vector.broadcast %1 : vector<1x32xf32> to vector<2x32xf32>
    %25 = arith.mulf %23, %24 : vector<2x32xf32>
    %26 = vector.extract_strided_slice %10 {offsets = [0, 2, 0], sizes = [2, 1, 32], strides = [1, 1, 1]} : vector<2x8x32xf32> to vector<2x1x32xf32>
    %27 = vector.shape_cast %26 : vector<2x1x32xf32> to vector<2x32xf32>
    %28 = arith.addf %25, %27 : vector<2x32xf32>
    %29 = math.tanh %28 : vector<2x32xf32>
    %30 = vector.broadcast %1 : vector<1x32xf32> to vector<2x32xf32>
    %31 = arith.mulf %29, %30 : vector<2x32xf32>
    %32 = vector.extract_strided_slice %10 {offsets = [0, 3, 0], sizes = [2, 1, 32], strides = [1, 1, 1]} : vector<2x8x32xf32> to vector<2x1x32xf32>
    %33 = vector.shape_cast %32 : vector<2x1x32xf32> to vector<2x32xf32>
    %34 = arith.addf %31, %33 : vector<2x32xf32>
    %35 = math.tanh %34 : vector<2x32xf32>
    %36 = vector.broadcast %1 : vector<1x32xf32> to vector<2x32xf32>
    %37 = arith.mulf %35, %36 : vector<2x32xf32>
    %38 = vector.extract_strided_slice %10 {offsets = [0, 4, 0], sizes = [2, 1, 32], strides = [1, 1, 1]} : vector<2x8x32xf32> to vector<2x1x32xf32>
    %39 = vector.shape_cast %38 : vector<2x1x32xf32> to vector<2x32xf32>
    %40 = arith.addf %37, %39 : vector<2x32xf32>
    %41 = math.tanh %40 : vector<2x32xf32>
    %42 = vector.broadcast %1 : vector<1x32xf32> to vector<2x32xf32>
    %43 = arith.mulf %41, %42 : vector<2x32xf32>
    %44 = vector.extract_strided_slice %10 {offsets = [0, 5, 0], sizes = [2, 1, 32], strides = [1, 1, 1]} : vector<2x8x32xf32> to vector<2x1x32xf32>
    %45 = vector.shape_cast %44 : vector<2x1x32xf32> to vector<2x32xf32>
    %46 = arith.addf %43, %45 : vector<2x32xf32>
    %47 = math.tanh %46 : vector<2x32xf32>
    %48 = vector.broadcast %1 : vector<1x32xf32> to vector<2x32xf32>
    %49 = arith.mulf %47, %48 : vector<2x32xf32>
    %50 = vector.extract_strided_slice %10 {offsets = [0, 6, 0], sizes = [2, 1, 32], strides = [1, 1, 1]} : vector<2x8x32xf32> to vector<2x1x32xf32>
    %51 = vector.shape_cast %50 : vector<2x1x32xf32> to vector<2x32xf32>
    %52 = arith.addf %49, %51 : vector<2x32xf32>
    %53 = math.tanh %52 : vector<2x32xf32>
    %54 = vector.broadcast %1 : vector<1x32xf32> to vector<2x32xf32>
    %55 = arith.mulf %53, %54 : vector<2x32xf32>
    %56 = vector.extract_strided_slice %10 {offsets = [0, 7, 0], sizes = [2, 1, 32], strides = [1, 1, 1]} : vector<2x8x32xf32> to vector<2x1x32xf32>
    %57 = vector.shape_cast %56 : vector<2x1x32xf32> to vector<2x32xf32>
    %58 = arith.addf %55, %57 : vector<2x32xf32>
    %59 = math.tanh %58 : vector<2x32xf32>
    %cst_10 = arith.constant dense<0.000000e+00> : vector<2x8xf32>
    %60 = tpu.matmul %59, %3, %cst_10 {dimension_numbers = #tpu.dot_dimension_numbers<[1], [0], [0], [1], [0, 0, 1, 1], [], []>} : vector<2x32xf32>, vector<32x8xf32>, vector<2x8xf32> -> vector<2x8xf32>
    %61 = vector.broadcast %4 : vector<1x8xf32> to vector<2x8xf32>
    %62 = arith.addf %60, %61 : vector<2x8xf32>
    %c0_11 = arith.constant 0 : index
    %c0_12 = arith.constant 0 : index
    %63 = vector.load %arg3[%c0_11, %c0_12] : memref<2x8xf32, #tpu.memory_space<vmem>>, vector<2x8xf32>
    tpu.vector_store %arg3[%c0_11, %c0_12], %62 {strides = array<i32>} : memref<2x8xf32, #tpu.memory_space<vmem>>, vector<2x8xf32>,
    return
  }
}

</mosaic_0001>

<llo_original>
// kernel: indrnn_forward.1
$region0: #{indrnn_forward.1}
  #allocation0 [shape = 'u32[]', space=smem, size = 0x4, offset = 0x4, fixed_abs, tag = 'smem constant byte address 0x4 - core index']
  #allocation1 [shape = 'u32[72,128]{1,0:T(1,128)}', space=vmem, size = 0x9000, scoped, tag = 'internal scratch']
  %s0 = inlined_call_operand.vmem [shape: f32[2,8,4], index: 0, kind: input, shape index: {}]
  %s1 = inlined_call_operand.vmem [shape: f32[6,32], index: 1, kind: input, shape index: {}]
  %s2 = inlined_call_operand.vmem [shape: f32[33,8], index: 2, kind: input, shape index: {}]
  %s3 = inlined_call_operand.hbm [shape: f32[2,8], index: 3, kind: output, shape index: {}]
  %s4 = sld [smem:[#allocation0]]
  $region22: #{indrnn_forward.1} parent=0
    _
  %s6 = ssub.s32 1, %s4
  %s7 = scalar_select 0, %s6, %s4
  $region1: #{indrnn_forward.1} parent=0
    #allocation2 [shape = 'u8[1024]{0}', space=vmem, size = 0x400, scoped, tag = 'output window, operand 0, single buffered']
    #allocation3 [shape = 's32[1]{0}', space=sflag, size = 0x4, scoped, tag = 'scoped memory for indrnn_forward.1']
    %8 = vsyncpa [#allocation3], 0
    // Predicated region
    $region2: #{indrnn_forward.1} parent=1 // pred_check
      _
    $region3: #{indrnn_forward.1} parent=1 // pred_check_branch
      %10 = sbr.rel (0) target = $region5
    $region4: #{indrnn_forward.1} parent=1 // pred_region
      _
    $region5: #{indrnn_forward.1} parent=1 // pred_fallthru
      _
    // Predicated region
    $region6: #{indrnn_forward.1} parent=1 // pred_check
      _
    $region7: #{indrnn_forward.1} parent=1 // pred_check_branch
      %12 = sbr.rel (0) target = $region9
    $region8: #{indrnn_forward.1} parent=1 // pred_region
      _
    $region9: #{indrnn_forward.1} parent=1 // pred_fallthru
      _
    // Predicated region
    $region10: #{indrnn_forward.1} parent=1 // pred_check
      _
    $region11: #{indrnn_forward.1} parent=1 // pred_check_branch
      %14 = sbr.rel (0) target = $region13
    $region12: #{indrnn_forward.1} parent=1 // pred_region
      _
    $region13: #{indrnn_forward.1} parent=1 // pred_fallthru
      _
    %v15 = vld [vmem:[%s1] sm:$0xf]
    %v16 = vld [vmem:[%s1 + $0x4] sm:$0x1]
    %v17 = vld [vmem:[%s1 + $0x5] sm:$0x1]
    %v18 = vld [vmem:[%s2] sm:$0xff]
    %v19 = vld [vmem:[%s2 + $0x8] sm:$0xff]
    %v20 = vld [vmem:[%s2 + $0x10] sm:$0xff]
    %v21 = vld [vmem:[%s2 + $0x18] sm:$0xff]
    %v22 = vld [vmem:[%s2 + $0x20] sm:$0x1]
    %v23 = vld [vmem:[%s0] sm:$0xff]
    %v24 = vld [vmem:[%s0 + $0x8] sm:$0xff]
    %v25 = vperm.slane %v17, 0
    %vm26 = vcmask 31744
    %v28 = vsel %vm26, %v23, 0
    %v31 = vsel %vm26, %v24, 0
    %vm33 = vcmask 1043456
    %v35 = vsel %vm33, %v15, 0
    %37 = vmatpush.msra.mxu0 0.0
    %38 = vmatpush.msra.mxu0 0.0
    %39 = vmatpush.msra.mxu0 0.0
    %40 = vmatpush.msra.mxu0 0.0
    %41 = vmatpush.msra.mxu0 0.0
    %42 = vmatpush.msra.mxu0 0.0
    %43 = vmatpush.msra.mxu0 0.0
    %44 = vmatpush.msra.mxu0 0.0
    %45 = vmatpush.msra.mxu0 0.0
    %46 = vmatpush.msra.mxu0 0.0
    %47 = vmatpush.msra.mxu0 0.0
    %48 = vmatpush.msra.mxu0 0.0
    %49 = vmatpush.msra.mxu0 0.0
    %50 = vmatpush.msra.mxu0 0.0
    %51 = vmatpush.msra.mxu0 0.0
    %52 = vmatpush.msra.mxu0 %v35
    %53 = vmatmul.f32.gmra.mxu0 %v28
    %v54 = vpop.f32.mrf.mxu0
    %v55 = vadd.f32 %v25, %v54
    %56 = vmatmul.f32.gmra.mxu0 %v31
    %v57 = vpop.f32.mrf.mxu0
    %v58 = vadd.f32 %v25, %v57
    %59 = vdwg.mxu0
    %v60 = vperm.slane %v16, 0
    %v61 = vmul.f32 %v60, 0.0
    %v64 = vrot.slane %v58, 7
    %vm65 = vcmask 1041409
    %v66 = vsel %vm65, %v64, %v55
    %v68 = vadd.f32 %v61, %v66
    %v69 = vtanh.pop %v68
    %v70 = vmul.f32 %v69, %v60
    %v71 = vrot.slane %v55, 1
    %v72 = vsel %vm65, %v58, %v71
    %v74 = vadd.f32 %v70, %v72
    %v75 = vtanh.pop %v74
    %v76 = vmul.f32 %v75, %v60
    %v77 = vrot.slane %v55, 2
    %v78 = vrot.slane %v58, 1
    %v79 = vsel %vm65, %v78, %v77
    %v81 = vadd.f32 %v76, %v79
    %v82 = vtanh.pop %v81
    %v83 = vmul.f32 %v82, %v60
    %v84 = vrot.slane %v55, 3
    %v85 = vrot.slane %v58, 2
    %v86 = vsel %vm65, %v85, %v84
    %v88 = vadd.f32 %v83, %v86
    %v89 = vtanh.pop %v88
    %v90 = vmul.f32 %v89, %v60
    %v91 = vrot.slane %v55, 4
    %v92 = vrot.slane %v58, 3
    %v93 = vsel %vm65, %v92, %v91
    %v95 = vadd.f32 %v90, %v93
    %v96 = vtanh.pop %v95
    %v97 = vmul.f32 %v96, %v60
    %v98 = vrot.slane %v55, 5
    %v99 = vrot.slane %v58, 4
    %v100 = vsel %vm65, %v99, %v98
    %v102 = vadd.f32 %v97, %v100
    %v103 = vtanh.pop %v102
    %v104 = vmul.f32 %v103, %v60
    %v105 = vrot.slane %v55, 6
    %v106 = vrot.slane %v58, 5
    %v107 = vsel %vm65, %v106, %v105
    %v109 = vadd.f32 %v104, %v107
    %v110 = vtanh.pop %v109
    %v111 = vmul.f32 %v110, %v60
    %v112 = vrot.slane %v55, 7
    %v113 = vrot.slane %v58, 6
    %v114 = vsel %vm65, %v113, %v112
    %v116 = vadd.f32 %v111, %v114
    %v117 = vtanh.pop %v116
    %v118 = vperm.slane %v22, 0
    %vm119 = vcmask 261120
    %v121 = vsel %vm119, %v117, 0
    %123 = vmatpush.msra.mxu0 0.0
    %124 = vmatpush.msra.mxu0 0.0
    %125 = vmatpush.msra.mxu0 0.0
    %126 = vmatpush.msra.mxu0 0.0
    %127 = vmatpush.msra.mxu0 0.0
    %128 = vmatpush.msra.mxu0 0.0
    %129 = vmatpush.msra.mxu0 0.0
    %130 = vmatpush.msra.mxu0 0.0
    %131 = vmatpush.msra.mxu0 0.0
    %132 = vmatpush.msra.mxu0 0.0
    %133 = vmatpush.msra.mxu0 0.0
    %134 = vmatpush.msra.mxu0 0.0
    %135 = vmatpush.msra.mxu0 %v21
    %136 = vmatpush.msra.mxu0 %v20
    %137 = vmatpush.msra.mxu0 %v19
    %138 = vmatpush.msra.mxu0 %v18
    %139 = vmatmul.f32.gmra.mxu0 %v121
    %v140 = vpop.f32.mrf.mxu0
    %v141 = vadd.f32 %v118, %v140
    %142 = vdwg.mxu0
    %vm143 = vcmask 58368
    %144 = vst.msk [vmem:[#allocation2] sm:$0x3] %vm143, %v141
    // Predicated region
    $region14: #{indrnn_forward.1} parent=1 // pred_check
      _
    $region15: #{indrnn_forward.1} parent=1 // pred_check_branch
      %146 = sbr.rel (0) target = $region17
    $region16: #{indrnn_forward.1} parent=1 // pred_region
      %148 = vsyncadd [#allocation3], 0
      %s150 = sshll.u32 [#allocation2], 4
      %s151 = int_to_ptr.vmem [resolvable:$true] %s150
      %s152 = sshll.u32 %s3, 4
      %s153 = int_to_ptr.hbm [resolvable:$true] %s152
      %155 = dma.vmem_to_hbm [thread:$0]  %s151, 32, %s153, [#allocation3]
    $region17: #{indrnn_forward.1} parent=1 // pred_fallthru
      _
    // Predicated region
    $region18: #{indrnn_forward.1} parent=1 // pred_check
      _
    $region19: #{indrnn_forward.1} parent=1 // pred_check_branch
      %157 = sbr.rel (0) target = $region21
    $region20: #{indrnn_forward.1} parent=1 // pred_region
      %159 = dma.done [#allocation3], 32
    $region21: #{indrnn_forward.1} parent=1 // pred_fallthru
      _
    %160 = vsyncpa [#allocation3], 1

</llo_original>
